<compile_context>
chip_gen: v7x
topology: tpu7x:2x2x1
jax: 0.10.0
libtpu: 0.0.40
codegen_flags: <defaults>
</compile_context>

<pallas_src>
import jax
import jax.numpy as jnp
from jax.experimental import pallas as pl
from jax.experimental.pallas import tpu as pltpu


def _round_up(x, m):
    return (x + m - 1) // m * m


def policy_kernel(x_ref, w1_ref, w2_ref, b1_ref, b2_ref, out_ref):
    """relu(x @ w1 + b1) @ w2 + b2 -> softmax over lanes (padded actions masked)."""
    x = x_ref[...]                                      # [TB, D_in]  (bf16 or f32)

    # fc1: MXU matmul with f32 accumulation; bias/ReLU stay f32 (v5e-safe epilogue).
    h = jnp.dot(x, w1_ref[...], preferred_element_type=jnp.float32)
    h = jnp.maximum(h + b1_ref[...], 0.0)               # [TB, H_pad] f32

    # fc2: single cast of the freshly computed activation (no-op on the f32 path).
    logits = jnp.dot(h.astype(w2_ref.dtype), w2_ref[...],
                     preferred_element_type=jnp.float32)
    # b2 is f32 and carries -1e30 on padded action columns; it must be added here,
    # in f32, AFTER the matmul (moving it into bf16 weights risks -inf/NaN).
    logits = logits + b2_ref[...]                       # [TB, A_pad] f32

    # Numerically-stable softmax along lanes; padded columns get exactly 0 probability.
    m = jnp.max(logits, axis=-1, keepdims=True)
    e = jnp.exp(logits - m)
    denom = jnp.sum(e, axis=-1, keepdims=True)
    r = pl.reciprocal(denom, approx=True)               # EUP slot
    r = r * (2.0 - denom * r)                           # one Newton step -> ~f32 accuracy
    out_ref[...] = (e * r).astype(out_ref.dtype)


def _choose_batch_tile(b, cap, align):
    """Pick (tile_rows, padded_batch).

    tile_rows is a multiple of `align` unless the whole batch fits in one block
    (block == full array dims is always legal).  Preferences: no batch padding
    (avoids an XLA pad copy of x), >= 2 grid steps for larger batches (v7x has two
    TensorCores), and tiles as large as possible (amortize ~0.35us/step overhead).
    """
    cap = max(align, _round_up(cap, align))
    if b <= max(align, 64):
        return b, b                                     # one full block, no padding
    b_r = _round_up(b, align)
    # Want at least two grid steps so ("parallel",) can use both v7x TensorCores.
    hi = min(cap, _round_up(pl.cdiv(b_r, 2), align))
    if b == b_r:
        # Largest aligned tile that divides the batch exactly -> no pad copy of x.
        tb = hi
        while tb >= align:
            if b_r % tb == 0:
                if b_r // tb <= 4 * pl.cdiv(b_r, cap):  # don't shatter into tiny tiles
                    return tb, b_r
                break
            tb -= align
    # Fallback: pad the batch (one small XLA copy) to a whole number of equal tiles.
    steps = max(2, pl.cdiv(b_r, cap))
    tb = _round_up(pl.cdiv(b_r, steps), align)
    return tb, tb * steps


def policy_forward(x, w1, b1, w2, b2, *, block_b=1024, use_bf16=True,
                   out_dtype=jnp.float32, padded_output=False):
    """Pallas forward pass: softmax(relu(x @ w1 + b1) @ w2 + b2, axis=-1).

    use_bf16=True feeds the MXU bf16 inputs with f32 accumulation (sound on
    v5e/v6e/v7x; the softmax epilogue is always f32).  Set use_bf16=False for
    bit-accurate f32 matmuls.  out_dtype=jnp.bfloat16 halves the output HBM stream;
    padded_output=True returns the lane-dense [b_pad, a_pad] buffer as-is (caller
    reads only [:batch, :action_dim]), skipping the wrapper slice pass.
    """
    mxu_dtype = jnp.bfloat16 if use_bf16 else jnp.float32
    x = jnp.asarray(x, mxu_dtype)                       # upstream producers should
    B, d_in = x.shape                                   # ideally emit bf16 directly
    h = w1.shape[1]
    a = w2.shape[1]
    h_pad = _round_up(h, 128)
    a_pad = _round_up(a, 128)

    # Resident parameter buffers: each lane-dense in its own width (no max(h,a) lane
    # waste), cast ONCE here, fetched by the kernel via a constant index_map.
    w1p = jnp.zeros((d_in, h_pad), mxu_dtype).at[:, :h].set(jnp.asarray(w1, mxu_dtype))
    w2p = jnp.zeros((h_pad, a_pad), mxu_dtype).at[:h, :a].set(jnp.asarray(w2, mxu_dtype))
    b1p = jnp.zeros((1, h_pad), jnp.float32).at[:, :h].set(
        jnp.asarray(b1, jnp.float32).reshape(1, h))
    # Padded action logits get a huge negative f32 bias -> softmax prob exactly 0.
    b2p = jnp.full((1, a_pad), -1e30, jnp.float32).at[:, :a].set(
        jnp.asarray(b2, jnp.float32).reshape(1, a))

    # Batch tiling: prefer tiles that divide B (no pad copy of x) and >= 2 grid steps.
    row_align = 16 if use_bf16 else 8                   # bf16 packs 2 rows / sublane
    tb, b_pad = _choose_batch_tile(B, block_b, row_align)
    if b_pad != B:
        x = jnp.pad(x, ((0, b_pad - B), (0, 0)))        # fallback path only
    grid_steps = b_pad // tb

    # VMEM budget: BlockSpec operands are double-buffered by default even when the
    # block index never changes; account for that explicitly.
    p_bytes = jnp.dtype(mxu_dtype).itemsize
    o_bytes = jnp.dtype(out_dtype).itemsize
    vmem_need = (2 * tb * d_in * p_bytes                          # x tiles
                 + 2 * (d_in * h_pad + h_pad * a_pad) * p_bytes   # resident weights
                 + 2 * (h_pad + a_pad) * 4                        # resident biases
                 + 2 * tb * a_pad * o_bytes                       # output tiles
                 + tb * (h_pad + a_pad) * 4)                      # f32 intermediates
    vmem_limit = int(min(max(32 << 20, 2 * vmem_need + (4 << 20)), 128 << 20))

    cost = pl.CostEstimate(
        flops=2 * b_pad * (d_in * h_pad + h_pad * a_pad),
        transcendentals=b_pad * (a_pad + 1),
        bytes_accessed=int(b_pad * d_in * p_bytes
                           + (d_in * h_pad + h_pad * a_pad) * p_bytes
                           + (h_pad + a_pad) * 4
                           + b_pad * a_pad * o_bytes),
    )

    out = pl.pallas_call(
        policy_kernel,
        out_shape=jax.ShapeDtypeStruct((b_pad, a_pad), out_dtype),
        grid=(grid_steps,),
        in_specs=[
            pl.BlockSpec((tb, d_in), lambda i: (i, 0)),       # activations: tiled over B
            pl.BlockSpec((d_in, h_pad), lambda i: (0, 0)),    # w1: resident, 1 DMA/call
            pl.BlockSpec((h_pad, a_pad), lambda i: (0, 0)),   # w2: resident, 1 DMA/call
            pl.BlockSpec((1, h_pad), lambda i: (0, 0)),       # b1 (f32): resident
            pl.BlockSpec((1, a_pad), lambda i: (0, 0)),       # b2 (f32, -1e30 pad mask)
        ],
        out_specs=pl.BlockSpec((tb, a_pad), lambda i: (i, 0)),
        compiler_params=pltpu.CompilerParams(
            dimension_semantics=("parallel",),                # batch steps -> 2 TCs on v7x
            vmem_limit_bytes=vmem_limit),
        cost_estimate=cost,
    )(x, w1p, w2p, b1p, b2p)

    if padded_output:
        return out                                      # caller reads [:B, :action_dim]
    return out[:B, :a]


def init_params(key, input_dim, hidden_dim, action_dim):
    # Deterministic synthetic init (mimics nn.Linear's U(-1/sqrt(fan_in), 1/sqrt(fan_in))).
    k1, k2, k3, k4 = jax.random.split(key, 4)
    lim1 = 1.0 / (input_dim ** 0.5)
    lim2 = 1.0 / (hidden_dim ** 0.5)
    w1 = jax.random.uniform(k1, (input_dim, hidden_dim), jnp.float32, -lim1, lim1)
    b1 = jax.random.uniform(k2, (1, hidden_dim), jnp.float32, -lim1, lim1)
    w2 = jax.random.uniform(k3, (hidden_dim, action_dim), jnp.float32, -lim2, lim2)
    b2 = jax.random.uniform(k4, (1, action_dim), jnp.float32, -lim2, lim2)
    return w1, b1, w2, b2


if __name__ == "__main__":
    input_dim, hidden_dim, action_dim = 16, 32, 8
    batch = 8

    key = jax.random.PRNGKey(0)
    kx, kp, kb = jax.random.split(key, 3)
    x = jax.random.normal(kx, (batch, input_dim), jnp.float32)
    w1, b1, w2, b2 = init_params(kp, input_dim, hidden_dim, action_dim)

    def reference(xv):
        return jax.nn.softmax(jnp.maximum(xv @ w1 + b1, 0.0) @ w2 + b2, axis=-1)

    # 1) bit-accurate f32 MXU path (single full block).
    probs_f32 = jax.block_until_ready(policy_forward(x, w1, b1, w2, b2, use_bf16=False))
    ref = reference(x)
    assert probs_f32.shape == (batch, action_dim)
    assert jnp.allclose(probs_f32, ref, atol=1e-5), "f32 path mismatch vs reference"
    assert jnp.allclose(jnp.sum(probs_f32, axis=-1), 1.0, atol=1e-5)

    # 2) default bf16-MXU path (f32 epilogue -> probabilities still sum to ~1).
    probs_bf16 = jax.block_until_ready(policy_forward(x, w1, b1, w2, b2))
    assert jnp.allclose(probs_bf16, ref, atol=5e-2), "bf16 path mismatch vs reference"
    assert jnp.allclose(jnp.sum(probs_bf16, axis=-1), 1.0, atol=1e-4)

    # 3) larger batch: exercises the batch grid (f32: 3 x 200-row tiles, no pad copy;
    #    bf16: 2 x 304-row tiles) and the resident weights.
    big = 600
    xb = jax.random.normal(kb, (big, input_dim), jnp.float32)
    ref_b = reference(xb)
    probs_big_f32 = jax.block_until_ready(
        policy_forward(xb, w1, b1, w2, b2, use_bf16=False))
    assert probs_big_f32.shape == (big, action_dim)
    assert jnp.allclose(probs_big_f32, ref_b, atol=1e-5), "f32 big-batch mismatch"
    assert jnp.allclose(jnp.sum(probs_big_f32, axis=-1), 1.0, atol=1e-5)

    probs_big_bf16 = jax.block_until_ready(policy_forward(xb, w1, b1, w2, b2))
    assert probs_big_bf16.shape == (big, action_dim)
    assert jnp.allclose(probs_big_bf16, ref_b, atol=5e-2), "bf16 big-batch mismatch"
    assert jnp.allclose(jnp.sum(probs_big_bf16, axis=-1), 1.0, atol=1e-4)

    # 4) reduced output HBM stream: bf16 probabilities.
    probs_out_bf16 = jax.block_until_ready(
        policy_forward(xb, w1, b1, w2, b2, out_dtype=jnp.bfloat16))
    assert probs_out_bf16.dtype == jnp.bfloat16
    assert jnp.allclose(probs_out_bf16.astype(jnp.float32), ref_b, atol=5e-2)

    print("KERNEL_OK")
</pallas_src>

<mosaic_0001>
module attributes {stable_mosaic.version = 11 : i64} {
  func.func @policy_kernel(%arg0: i32, %arg1: memref<8x16xf32, #tpu.memory_space<vmem>>, %arg2: memref<16x128xf32, #tpu.memory_space<vmem>>, %arg3: memref<128x128xf32, #tpu.memory_space<vmem>>, %arg4: memref<1x128xf32, #tpu.memory_space<vmem>>, %arg5: memref<1x128xf32, #tpu.memory_space<vmem>>, %arg6: memref<8x128xf32, #tpu.memory_space<vmem>>) attributes {dimension_semantics = [#tpu.dimension_semantics<parallel>], iteration_bounds = array<i64: 1>, scalar_prefetch = 0 : i64, scratch_operands = 0 : i64, tpu.core_type = #tpu.core_type<tc>, window_params = [{transform_indices = @transform_0, window_bounds = array<i64: 8, 16>}, {pipeline_mode = #tpu.pipeline_mode<synchronous>, transform_indices = @transform_1, window_bounds = array<i64: 16, 128>}, {pipeline_mode = #tpu.pipeline_mode<synchronous>, transform_indices = @transform_2, window_bounds = array<i64: 128, 128>}, {pipeline_mode = #tpu.pipeline_mode<synchronous>, transform_indices = @transform_3, window_bounds = array<i64: 1, 128>}, {pipeline_mode = #tpu.pipeline_mode<synchronous>, transform_indices = @transform_4, window_bounds = array<i64: 1, 128>}, {transform_indices = @transform_5, window_bounds = array<i64: 8, 128>}]} {
    %c0 = arith.constant 0 : index
    %c0_0 = arith.constant 0 : index
    %0 = vector.load %arg1[%c0, %c0_0] : memref<8x16xf32, #tpu.memory_space<vmem>>, vector<8x16xf32>
    %c0_1 = arith.constant 0 : index
    %c0_2 = arith.constant 0 : index
    %1 = vector.load %arg2[%c0_1, %c0_2] : memref<16x128xf32, #tpu.memory_space<vmem>>, vector<16x128xf32>
    %cst = arith.constant dense<0.000000e+00> : vector<8x128xf32>
    %2 = tpu.matmul %0, %1, %cst {dimension_numbers = #tpu.dot_dimension_numbers<[1], [0], [0], [1], [0, 0, 1, 1], [], []>} : vector<8x16xf32>, vector<16x128xf32>, vector<8x128xf32> -> vector<8x128xf32>
    %c0_3 = arith.constant 0 : index
    %c0_4 = arith.constant 0 : index
    %3 = vector.load %arg4[%c0_3, %c0_4] : memref<1x128xf32, #tpu.memory_space<vmem>>, vector<1x128xf32>
    %4 = vector.broadcast %3 : vector<1x128xf32> to vector<8x128xf32>
    %5 = arith.addf %2, %4 : vector<8x128xf32>
    %cst_5 = arith.constant 0.000000e+00 : f32
    %6 = vector.broadcast %cst_5 : f32 to vector<8x128xf32>
    %7 = arith.maximumf %5, %6 : vector<8x128xf32>
    %c0_6 = arith.constant 0 : index
    %c0_7 = arith.constant 0 : index
    %8 = vector.load %arg3[%c0_6, %c0_7] : memref<128x128xf32, #tpu.memory_space<vmem>>, vector<128x128xf32>
    %cst_8 = arith.constant dense<0.000000e+00> : vector<8x128xf32>
    %9 = tpu.matmul %7, %8, %cst_8 {dimension_numbers = #tpu.dot_dimension_numbers<[1], [0], [0], [1], [0, 0, 1, 1], [], []>} : vector<8x128xf32>, vector<128x128xf32>, vector<8x128xf32> -> vector<8x128xf32>
    %c0_9 = arith.constant 0 : index
    %c0_10 = arith.constant 0 : index
    %10 = vector.load %arg5[%c0_9, %c0_10] : memref<1x128xf32, #tpu.memory_space<vmem>>, vector<1x128xf32>
    %11 = vector.broadcast %10 : vector<1x128xf32> to vector<8x128xf32>
    %12 = arith.addf %9, %11 : vector<8x128xf32>
    %cst_11 = arith.constant dense<0xFF800000> : vector<8xf32>
    %13 = vector.multi_reduction <maximumf>, %12, %cst_11 [1] : vector<8x128xf32> to vector<8xf32>
    %14 = vector.shape_cast %13 : vector<8xf32> to vector<8x1xf32>
    %15 = vector.broadcast %14 : vector<8x1xf32> to vector<8x128xf32>
    %16 = arith.subf %12, %15 : vector<8x128xf32>
    %17 = math.exp %16 : vector<8x128xf32>
    %cst_12 = arith.constant dense<0.000000e+00> : vector<8xf32>
    %18 = vector.multi_reduction <add>, %17, %cst_12 [1] : vector<8x128xf32> to vector<8xf32>
    %19 = vector.shape_cast %18 : vector<8xf32> to vector<8x1xf32>
    %20 = tpu.reciprocal %19 {approx = true} : vector<8x1xf32> -> vector<8x1xf32>
    %21 = arith.mulf %19, %20 : vector<8x1xf32>
    %cst_13 = arith.constant 2.000000e+00 : f32
    %22 = vector.broadcast %cst_13 : f32 to vector<8x1xf32>
    %23 = arith.subf %22, %21 : vector<8x1xf32>
    %24 = arith.mulf %20, %23 : vector<8x1xf32>
    %25 = vector.broadcast %24 : vector<8x1xf32> to vector<8x128xf32>
    %26 = arith.mulf %17, %25 : vector<8x128xf32>
    %c0_14 = arith.constant 0 : index
    %c0_15 = arith.constant 0 : index
    %27 = vector.load %arg6[%c0_14, %c0_15] : memref<8x128xf32, #tpu.memory_space<vmem>>, vector<8x128xf32>
    tpu.vector_store %arg6[%c0_14, %c0_15], %26 {strides = array<i32>} : memref<8x128xf32, #tpu.memory_space<vmem>>, vector<8x128xf32>,
    return
  }
  func.func @transform_0(%arg0: i32) -> (i32, i32) {
    %c0_i32 = arith.constant 0 : i32
    %c0_i32_0 = arith.constant 0 : i32
    return %arg0, %c0_i32 : i32, i32
  }
  func.func @transform_1(%arg0: i32) -> (i32, i32) {
    %c0_i32 = arith.constant 0 : i32
    %c0_i32_0 = arith.constant 0 : i32
    %c0_i32_1 = arith.constant 0 : i32
    return %c0_i32, %c0_i32_0 : i32, i32
  }
  func.func @transform_2(%arg0: i32) -> (i32, i32) {
    %c0_i32 = arith.constant 0 : i32
    %c0_i32_0 = arith.constant 0 : i32
    %c0_i32_1 = arith.constant 0 : i32
    return %c0_i32, %c0_i32_0 : i32, i32
  }
  func.func @transform_3(%arg0: i32) -> (i32, i32) {
    %c0_i32 = arith.constant 0 : i32
    %c0_i32_0 = arith.constant 0 : i32
    %c0_i32_1 = arith.constant 0 : i32
    return %c0_i32, %c0_i32_0 : i32, i32
  }
  func.func @transform_4(%arg0: i32) -> (i32, i32) {
    %c0_i32 = arith.constant 0 : i32
    %c0_i32_0 = arith.constant 0 : i32
    %c0_i32_1 = arith.constant 0 : i32
    return %c0_i32, %c0_i32_0 : i32, i32
  }
  func.func @transform_5(%arg0: i32) -> (i32, i32) {
    %c0_i32 = arith.constant 0 : i32
    %c0_i32_0 = arith.constant 0 : i32
    return %arg0, %c0_i32 : i32, i32
  }
}

</mosaic_0001>

<llo_original>
// kernel: tpu_custom_call.1
$region0: #{tpu_custom_call.1}
  #allocation0 [shape = 'u32[]', space=smem, size = 0x4, offset = 0x4, fixed_abs, tag = 'smem constant byte address 0x4 - core index']
  #allocation1 [shape = 'u32[144,128]{1,0:T(1,128)}', space=vmem, size = 0x12000, scoped, tag = 'internal scratch']
  %s0 = inlined_call_operand.hbm [shape: f32[8,16], index: 0, kind: input, shape index: {}]
  %s1 = inlined_call_operand.hbm [shape: f32[16,128], index: 1, kind: input, shape index: {}]
  %s2 = inlined_call_operand.hbm [shape: f32[128,128], index: 2, kind: input, shape index: {}]
  %s3 = inlined_call_operand.vmem [shape: f32[1,128], index: 3, kind: input, shape index: {}]
  %s4 = inlined_call_operand.vmem [shape: f32[1,128], index: 4, kind: input, shape index: {}]
  %s5 = inlined_call_operand.hbm [shape: f32[8,128], index: 5, kind: output, shape index: {}]
  %s6 = sld [smem:[#allocation0]]
  $region42: #{tpu_custom_call.1} parent=0
    _
  %s8 = ssub.s32 1, %s6
  %s9 = scalar_select 0, %s8, %s6
  $region1: #{tpu_custom_call.1} parent=0
    #allocation2 [shape = 'u8[4096]{0}', space=vmem, size = 0x1000, scoped, tag = 'input window, operand 0, single buffered']
    #allocation3 [shape = 's32[1]{0}', space=sflag, size = 0x4, scoped, tag = 'scoped memory for tpu_custom_call.1']
    #allocation4 [shape = 's32[1]{0}', space=sflag, size = 0x4, scoped, tag = 'scoped memory for tpu_custom_call.1']
    #allocation5 [shape = 'u8[8192]{0}', space=vmem, size = 0x2000, scoped, tag = 'input window, operand 1, single buffered']
    #allocation6 [shape = 's32[1]{0}', space=sflag, size = 0x4, scoped, tag = 'scoped memory for tpu_custom_call.1']
    #allocation7 [shape = 'u8[65536]{0}', space=vmem, size = 0x10000, scoped, tag = 'input window, operand 2, single buffered']
    #allocation8 [shape = 'u8[4096]{0}', space=vmem, size = 0x1000, scoped, tag = 'output window, operand 0, single buffered']
    %10 = vsyncpa [#allocation3], 0
    %11 = vsyncpa [#allocation6], 0
    %12 = vsyncpa [#allocation4], 0
    // Predicated region
    $region2: #{tpu_custom_call.1} parent=1 // pred_check
      _
    $region3: #{tpu_custom_call.1} parent=1 // pred_check_branch
      %14 = sbr.rel (0) target = $region5
    $region4: #{tpu_custom_call.1} parent=1 // pred_region
      %s16 = ssub.s32 128, 128
      %17 = vsyncadd [#allocation3], %s16
      %s19 = sshll.u32 [#allocation2], 4
      %s20 = int_to_ptr.vmem [resolvable:$true] %s19
      %22 = dma.hbm_to_vmem [thread:$0]  %s0, 128, %s20, [#allocation3]
    $region5: #{tpu_custom_call.1} parent=1 // pred_fallthru
      _
    // Predicated region
    $region6: #{tpu_custom_call.1} parent=1 // pred_check
      _
    $region7: #{tpu_custom_call.1} parent=1 // pred_check_branch
      %24 = sbr.rel (0) target = $region9
    $region8: #{tpu_custom_call.1} parent=1 // pred_region
      %s26 = ssub.s32 256, 256
      %27 = vsyncadd [#allocation6], %s26
      %s28 = sshll.u32 [#allocation5], 4
      %s29 = int_to_ptr.vmem [resolvable:$true] %s28
      %34 = dma.hbm_to_vmem [thread:$0]  %s1, 256, %s29, [#allocation6], 128, 128, 8
    $region9: #{tpu_custom_call.1} parent=1 // pred_fallthru
      _
    // Predicated region
    $region10: #{tpu_custom_call.1} parent=1 // pred_check
      _
    $region11: #{tpu_custom_call.1} parent=1 // pred_check_branch
      %36 = sbr.rel (0) target = $region13
    $region12: #{tpu_custom_call.1} parent=1 // pred_region
      %s38 = ssub.s32 2048, 2048
      %39 = vsyncadd [#allocation6], %s38
      %s40 = sshll.u32 [#allocation7], 4
      %s41 = int_to_ptr.vmem [resolvable:$true] %s40
      %46 = dma.hbm_to_vmem [thread:$0]  %s2, 2048, %s41, [#allocation6], 128, 128, 8
    $region13: #{tpu_custom_call.1} parent=1 // pred_fallthru
      _
    // Predicated region
    $region14: #{tpu_custom_call.1} parent=1 // pred_check
      _
    $region15: #{tpu_custom_call.1} parent=1 // pred_check_branch
      %48 = sbr.rel (0) target = $region17
    $region16: #{tpu_custom_call.1} parent=1 // pred_region
      _
    $region17: #{tpu_custom_call.1} parent=1 // pred_fallthru
      _
    // Predicated region
    $region18: #{tpu_custom_call.1} parent=1 // pred_check
      _
    $region19: #{tpu_custom_call.1} parent=1 // pred_check_branch
      %50 = sbr.rel (0) target = $region21
    $region20: #{tpu_custom_call.1} parent=1 // pred_region
      _
    $region21: #{tpu_custom_call.1} parent=1 // pred_fallthru
      _
    // Predicated region
    $region22: #{tpu_custom_call.1} parent=1 // pred_check
      _
    $region23: #{tpu_custom_call.1} parent=1 // pred_check_branch
      %52 = sbr.rel (0) target = $region25
    $region24: #{tpu_custom_call.1} parent=1 // pred_region
      %53 = dma.done [#allocation3], 128
    $region25: #{tpu_custom_call.1} parent=1 // pred_fallthru
      _
    // Predicated region
    $region26: #{tpu_custom_call.1} parent=1 // pred_check
      _
    $region27: #{tpu_custom_call.1} parent=1 // pred_check_branch
      %55 = sbr.rel (0) target = $region29
    $region28: #{tpu_custom_call.1} parent=1 // pred_region
      %56 = dma.done [#allocation6], 256
    $region29: #{tpu_custom_call.1} parent=1 // pred_fallthru
      _
    // Predicated region
    $region30: #{tpu_custom_call.1} parent=1 // pred_check
      _
    $region31: #{tpu_custom_call.1} parent=1 // pred_check_branch
      %58 = sbr.rel (0) target = $region33
    $region32: #{tpu_custom_call.1} parent=1 // pred_region
      %59 = dma.done [#allocation6], 2048
    $region33: #{tpu_custom_call.1} parent=1 // pred_fallthru
      _
    %v60 = vld [vmem:[#allocation2] sm:$0xff]
    %v61 = vld [vmem:[#allocation5] sm:$0xff]
    %v62 = vld [vmem:[#allocation5 + $0x8] sm:$0xff]
    %v63 = vld [vmem:[%s3] sm:$0x1]
    %v65 = vlaneseq
    %v66 = vshrl.u32 %v65, 7
    %v67 = vsub.s32 0, %v66
    %v68 = vrot.slane %v63, %v67
    %vm70 = vcmask 130048
    %v72 = vsel %vm70, %v60, 0
    %74 = vmatprep.subr.mxu0 0.0
    %75 = vmatpush1.msra.mxu0 %v61
    %76 = vmatprep.subr.mxu0 0.0
    %77 = vmatpush1.msra.mxu0 %v62
    %78 = vmatprep.subr.mxu0 0.0
    %79 = vmatpush1.msra.mxu0 0.0
    %80 = vmatprep.subr.mxu0 0.0
    %81 = vmatpush1.msra.mxu0 0.0
    %82 = vmatprep.subr.mxu0 0.0
    %83 = vmatpush1.msra.mxu0 0.0
    %84 = vmatprep.subr.mxu0 0.0
    %85 = vmatpush1.msra.mxu0 0.0
    %86 = vmatprep.subr.mxu0 0.0
    %87 = vmatpush1.msra.mxu0 0.0
    %88 = vmatprep.subr.mxu0 0.0
    %89 = vmatpush1.msra.mxu0 0.0
    %90 = vmatprep.subr.mxu0 0.0
    %91 = vmatpush1.msra.mxu0 0.0
    %92 = vmatprep.subr.mxu0 0.0
    %93 = vmatpush1.msra.mxu0 0.0
    %94 = vmatprep.subr.mxu0 0.0
    %95 = vmatpush1.msra.mxu0 0.0
    %96 = vmatprep.subr.mxu0 0.0
    %97 = vmatpush1.msra.mxu0 0.0
    %98 = vmatprep.subr.mxu0 0.0
    %99 = vmatpush1.msra.mxu0 0.0
    %100 = vmatprep.subr.mxu0 0.0
    %101 = vmatpush1.msra.mxu0 0.0
    %102 = vmatprep.subr.mxu0 0.0
    %103 = vmatpush1.msra.mxu0 0.0
    %104 = vmatprep.subr.mxu0 0.0
    %105 = vmatpush1.msra.mxu0 0.0
    %106 = vmatprep.subr.mxu0 0.0
    %107 = vmatpush1.msra.mxu0 0.0
    %108 = vmatprep.subr.mxu0 0.0
    %109 = vmatpush1.msra.mxu0 0.0
    %110 = vmatprep.subr.mxu0 0.0
    %111 = vmatpush1.msra.mxu0 0.0
    %112 = vmatprep.subr.mxu0 0.0
    %113 = vmatpush1.msra.mxu0 0.0
    %114 = vmatprep.subr.mxu0 0.0
    %115 = vmatpush1.msra.mxu0 0.0
    %116 = vmatprep.subr.mxu0 0.0
    %117 = vmatpush1.msra.mxu0 0.0
    %118 = vmatprep.subr.mxu0 0.0
    %119 = vmatpush1.msra.mxu0 0.0
    %120 = vmatprep.subr.mxu0 0.0
    %121 = vmatpush1.msra.mxu0 0.0
    %122 = vmatprep.subr.mxu0 0.0
    %123 = vmatpush1.msra.mxu0 0.0
    %124 = vmatprep.subr.mxu0 0.0
    %125 = vmatpush1.msra.mxu0 0.0
    %126 = vmatprep.subr.mxu0 0.0
    %127 = vmatpush1.msra.mxu0 0.0
    %128 = vmatprep.subr.mxu0 0.0
    %129 = vmatpush1.msra.mxu0 0.0
    %130 = vmatprep.subr.mxu0 0.0
    %131 = vmatpush1.msra.mxu0 0.0
    %132 = vmatprep.subr.mxu0 0.0
    %133 = vmatpush1.msra.mxu0 0.0
    %134 = vmatprep.subr.mxu0 0.0
    %135 = vmatpush1.msra.mxu0 0.0
    %136 = vmatprep.subr.mxu0 0.0
    %137 = vmatpush1.msra.mxu0 0.0
    %138 = vmatprep.mubr.f32.mxu0 0.0
    %139 = vmatmul.mubr.f32.gmra.mrb[0].mxu0 %v72
    %v140 = vpop.f32.mrb[0].mxu0
    %v141 = vadd.f32 %v68, %v140
    %v142 = vpop.f32.mrb[0].mxu0
    %143 = vdwg.mxu0
    %v144 = vmax.f32 %v141, 0.0
    %v145 = vld [vmem:[#allocation7] sm:$0xff]
    %v146 = vld [vmem:[#allocation7 + $0x8] sm:$0xff]
    %v147 = vld [vmem:[#allocation7 + $0x10] sm:$0xff]
    %v148 = vld [vmem:[#allocation7 + $0x18] sm:$0xff]
    %v149 = vld [vmem:[#allocation7 + $0x20] sm:$0xff]
    %v150 = vld [vmem:[#allocation7 + $0x28] sm:$0xff]
    %v151 = vld [vmem:[#allocation7 + $0x30] sm:$0xff]
    %v152 = vld [vmem:[#allocation7 + $0x38] sm:$0xff]
    %v153 = vld [vmem:[#allocation7 + $0x40] sm:$0xff]
    %v154 = vld [vmem:[#allocation7 + $0x48] sm:$0xff]
    %v155 = vld [vmem:[#allocation7 + $0x50] sm:$0xff]
    %v156 = vld [vmem:[#allocation7 + $0x58] sm:$0xff]
    %v157 = vld [vmem:[#allocation7 + $0x60] sm:$0xff]
    %v158 = vld [vmem:[#allocation7 + $0x68] sm:$0xff]
    %v159 = vld [vmem:[#allocation7 + $0x70] sm:$0xff]
    %v160 = vld [vmem:[#allocation7 + $0x78] sm:$0xff]
    %v161 = vld [vmem:[%s4] sm:$0x1]
    %v163 = vlaneseq
    %v164 = vshrl.u32 %v163, 7
    %v165 = vsub.s32 0, %v164
    %v166 = vrot.slane %v161, %v165
    %168 = vmatprep.subr.mxu0 0.0
    %169 = vmatpush1.msra.mxu0 %v145
    %170 = vmatprep.subr.mxu0 0.0
    %171 = vmatpush1.msra.mxu0 %v146
    %172 = vmatprep.subr.mxu0 0.0
    %173 = vmatpush1.msra.mxu0 %v147
    %174 = vmatprep.subr.mxu0 0.0
    %175 = vmatpush1.msra.mxu0 %v148
    %176 = vmatprep.subr.mxu0 0.0
    %177 = vmatpush1.msra.mxu0 %v149
    %178 = vmatprep.subr.mxu0 0.0
    %179 = vmatpush1.msra.mxu0 %v150
    %180 = vmatprep.subr.mxu0 0.0
    %181 = vmatpush1.msra.mxu0 %v151
    %182 = vmatprep.subr.mxu0 0.0
    %183 = vmatpush1.msra.mxu0 %v152
    %184 = vmatprep.subr.mxu0 0.0
    %185 = vmatpush1.msra.mxu0 %v153
    %186 = vmatprep.subr.mxu0 0.0
    %187 = vmatpush1.msra.mxu0 %v154
    %188 = vmatprep.subr.mxu0 0.0
    %189 = vmatpush1.msra.mxu0 %v155
    %190 = vmatprep.subr.mxu0 0.0
    %191 = vmatpush1.msra.mxu0 %v156
    %192 = vmatprep.subr.mxu0 0.0
    %193 = vmatpush1.msra.mxu0 %v157
    %194 = vmatprep.subr.mxu0 0.0
    %195 = vmatpush1.msra.mxu0 %v158
    %196 = vmatprep.subr.mxu0 0.0
    %197 = vmatpush1.msra.mxu0 %v159
    %198 = vmatprep.subr.mxu0 0.0
    %199 = vmatpush1.msra.mxu0 %v160
    %200 = vmatprep.subr.mxu0 0.0
    %201 = vmatpush1.msra.mxu0 0.0
    %202 = vmatprep.subr.mxu0 0.0
    %203 = vmatpush1.msra.mxu0 0.0
    %204 = vmatprep.subr.mxu0 0.0
    %205 = vmatpush1.msra.mxu0 0.0
    %206 = vmatprep.subr.mxu0 0.0
    %207 = vmatpush1.msra.mxu0 0.0
    %208 = vmatprep.subr.mxu0 0.0
    %209 = vmatpush1.msra.mxu0 0.0
    %210 = vmatprep.subr.mxu0 0.0
    %211 = vmatpush1.msra.mxu0 0.0
    %212 = vmatprep.subr.mxu0 0.0
    %213 = vmatpush1.msra.mxu0 0.0
    %214 = vmatprep.subr.mxu0 0.0
    %215 = vmatpush1.msra.mxu0 0.0
    %216 = vmatprep.subr.mxu0 0.0
    %217 = vmatpush1.msra.mxu0 0.0
    %218 = vmatprep.subr.mxu0 0.0
    %219 = vmatpush1.msra.mxu0 0.0
    %220 = vmatprep.subr.mxu0 0.0
    %221 = vmatpush1.msra.mxu0 0.0
    %222 = vmatprep.subr.mxu0 0.0
    %223 = vmatpush1.msra.mxu0 0.0
    %224 = vmatprep.subr.mxu0 0.0
    %225 = vmatpush1.msra.mxu0 0.0
    %226 = vmatprep.subr.mxu0 0.0
    %227 = vmatpush1.msra.mxu0 0.0
    %228 = vmatprep.subr.mxu0 0.0
    %229 = vmatpush1.msra.mxu0 0.0
    %230 = vmatprep.subr.mxu0 0.0
    %231 = vmatpush1.msra.mxu0 0.0
    %232 = vmatprep.mubr.f32.mxu0 0.0
    %233 = vmatmul.mubr.f32.gmra.mrb[0].mxu0 %v144
    %v234 = vpop.f32.mrb[0].mxu0
    %v235 = vadd.f32 %v166, %v234
    %v236 = vpop.f32.mrb[0].mxu0
    %237 = vdwg.mxu0
    %238 = vmax.xlane.f32.xlu0 %v235
    %v239 = vpop.xlane.xlu0 %238
    %v240 = vsub.f32 %v235, %v239
    %v241 = vmul.f32 %v240, 1.442695
    %v242 = vpow.pop %v241
    %243 = vadd.xlane.f32.xlu0 %v242
    %v244 = vpop.xlane.xlu0 %243
    %v245 = vrcp.pop %v244
    %v246 = vmul.f32 %v244, %v245
    %v247 = vsub.f32 2.0, %v246
    %v248 = vmul.f32 %v245, %v247
    %v249 = vmul.f32 %v242, %v248
    %250 = vst [vmem:[#allocation8] sm:$0xff] %v249
    // Predicated region
    $region34: #{tpu_custom_call.1} parent=1 // pred_check
      _
    $region35: #{tpu_custom_call.1} parent=1 // pred_check_branch
      %252 = sbr.rel (0) target = $region37
    $region36: #{tpu_custom_call.1} parent=1 // pred_region
      %s254 = ssub.s32 128, 128
      %255 = vsyncadd [#allocation4], %s254
      %s257 = sshll.u32 [#allocation8], 4
      %s258 = int_to_ptr.vmem [resolvable:$true] %s257
      %260 = dma.vmem_to_hbm [thread:$0]  %s258, 128, %s5, [#allocation4]
    $region37: #{tpu_custom_call.1} parent=1 // pred_fallthru
      _
    // Predicated region
    $region38: #{tpu_custom_call.1} parent=1 // pred_check
      _
    $region39: #{tpu_custom_call.1} parent=1 // pred_check_branch
      %262 = sbr.rel (0) target = $region41
    $region40: #{tpu_custom_call.1} parent=1 // pred_region
      %263 = dma.done [#allocation4], 128
    $region41: #{tpu_custom_call.1} parent=1 // pred_fallthru
      _
    %264 = vsyncpa [#allocation3], 1
    %265 = vsyncpa [#allocation6], 1
    %266 = vsyncpa [#allocation4], 1

</llo_original>
